<compile_context>
chip_gen: v7x
topology: tpu7x:2x2x1
jax: 0.10.0
libtpu: 0.0.40
codegen_flags: <defaults>
</compile_context>

<pallas_src>
import functools

import jax
import jax.numpy as jnp
from jax.experimental import pallas as pl
from jax.experimental.pallas import tpu as pltpu


def _round_up(x, m):
    return (x + m - 1) // m * m


# ------------------------------ fused kernel -------------------------------

def _ffn_fused_kernel(*refs, n_hidden):
    """Fused FFN forward.

    Positional refs:
      x_ref, w_in_ref,
      (w_h_0, b_h_0, ..., w_h_{n-1}, b_h_{n-1}),
      w_out_ref,
      out_ref
    """
    x_ref = refs[0]
    w_in_ref = refs[1]
    hidden_refs = refs[2:2 + 2 * n_hidden]
    w_out_ref = refs[2 + 2 * n_hidden]
    out_ref = refs[3 + 2 * n_hidden]

    # in_layer: Linear(no bias) + ReLU.  bf16 MXU inputs, f32 accumulation.
    h = jnp.dot(x_ref[...], w_in_ref[...], preferred_element_type=jnp.float32)
    # Chain the activation as a local bf16 value: Mosaic keeps it in vregs for small tiles and
    # spills to a bf16 VMEM slab for big ones — half the traffic of the old f32 scratch, and no
    # per-layer astype on a stored f32 value.
    act = jnp.maximum(h, 0.0).astype(w_in_ref.dtype)

    # hidden layers, statically unrolled: Linear + bias + ReLU.
    # Bias add + ReLU stay in f32 (on the f32 MXU result); single cast to bf16 per layer.
    for l in range(n_hidden):
        w_ref = hidden_refs[2 * l]
        b_ref = hidden_refs[2 * l + 1]
        h = jnp.dot(act, w_ref[...], preferred_element_type=jnp.float32)
        act = jnp.maximum(h + b_ref[...], 0.0).astype(w_ref.dtype)   # bias (1, H) f32 broadcasts

    # out_layer: Linear(no bias).  Store bf16 (lane-dense, halves the HBM output stream).
    out = jnp.dot(act, w_out_ref[...], preferred_element_type=jnp.float32)
    out_ref[...] = out.astype(out_ref.dtype)


# ------------------------------ parameters ---------------------------------

def init_feedforward_params(key, in_size, out_size, hidden_layer_size=250, depth=2,
                            param_dtype=jnp.bfloat16):
    """nn.Linear-style init (uniform(-1/sqrt(fan_in), +)), stored as (fan_in, fan_out),
    zero-padded to multiples of 128 on every feature dim, weights cast to bf16."""
    in_p = _round_up(in_size, 128)
    hid_p = _round_up(hidden_layer_size, 128)
    out_p = _round_up(out_size, 128)

    def uniform(k, shape, fan_in):
        bound = 1.0 / float(fan_in) ** 0.5
        return jax.random.uniform(k, shape, jnp.float32, -bound, bound)

    def pad2(w, rows, cols):
        return jnp.zeros((rows, cols), jnp.float32).at[:w.shape[0], :w.shape[1]].set(w)

    n_hidden = max(depth - 2, 0)
    keys = jax.random.split(key, 2 + 2 * n_hidden)
    ki = 0

    w_in = uniform(keys[ki], (in_size, hidden_layer_size), in_size); ki += 1
    params = {"w_in": pad2(w_in, in_p, hid_p).astype(param_dtype), "hidden": []}

    for _ in range(n_hidden):
        w = uniform(keys[ki], (hidden_layer_size, hidden_layer_size), hidden_layer_size); ki += 1
        b = uniform(keys[ki], (hidden_layer_size,), hidden_layer_size); ki += 1
        w_p = pad2(w, hid_p, hid_p).astype(param_dtype)
        b_p = jnp.zeros((1, hid_p), jnp.float32).at[0, :hidden_layer_size].set(b)  # bias kept f32
        params["hidden"].append((w_p, b_p))

    w_out = uniform(keys[ki], (hidden_layer_size, out_size), hidden_layer_size); ki += 1
    params["w_out"] = pad2(w_out, hid_p, out_p).astype(param_dtype)
    return params


# ------------------------------ forward pass --------------------------------

def _pick_tile_m(batch):
    """Batch tile (multiple of 8 rows):
       - tiny batch: one tile covering the batch,
       - batch >= 16: at least 2 grid steps so the "parallel" axis shards across both
         TensorCores on v7x (tile sized to the batch -> no whole tiles of zero rows),
       - batch >= 1024: 512-row tiles to amortize the ~0.35 us per-grid-step overhead
         (weights are resident, so VMEM is nowhere near the limit)."""
    if batch < 16:
        return _round_up(max(batch, 1), 8)
    if batch >= 1024:
        return 512
    return min(256, _round_up(pl.cdiv(batch, 2), 8))


def feedforward_forward(params, x, out_size):
    batch, in_size = x.shape
    in_p, hid_p = params["w_in"].shape
    out_p = params["w_out"].shape[1]
    n_hidden = len(params["hidden"])
    compute_dtype = params["w_in"].dtype

    tile_m = _pick_tile_m(batch)
    m_pad = _round_up(batch, tile_m)

    x_pad = jnp.zeros((m_pad, in_p), compute_dtype).at[:batch, :in_size].set(
        x.astype(compute_dtype))

    operands = [x_pad, params["w_in"]]
    in_specs = [
        pl.BlockSpec((tile_m, in_p), lambda i: (i, 0)),      # batch-tiled activation input
        pl.BlockSpec((in_p, hid_p), lambda i: (0, 0)),       # weights: resident, constant block
    ]
    for (w, b) in params["hidden"]:
        operands += [w, b]
        in_specs += [
            pl.BlockSpec((hid_p, hid_p), lambda i: (0, 0)),
            pl.BlockSpec((1, hid_p), lambda i: (0, 0)),
        ]
    operands.append(params["w_out"])
    in_specs.append(pl.BlockSpec((hid_p, out_p), lambda i: (0, 0)))

    # VMEM accounting: constant-index weights/biases are DMA'd once (counted once); the
    # batch-tiled x/out streams are double-buffered by the pipeline; the chained activation
    # needs one bf16 slab plus one f32 matmul-result slab.
    weight_bytes = sum(int(a.size) * a.dtype.itemsize for a in operands[1:])
    x_tile_bytes = 2 * tile_m * in_p * 2       # double-buffered bf16 input tile
    out_tile_bytes = 2 * tile_m * out_p * 2    # double-buffered bf16 output tile
    act_bytes = tile_m * hid_p * (2 + 4)       # bf16 chained activation + f32 MXU result
    resident = weight_bytes + x_tile_bytes + out_tile_bytes + act_bytes
    if resident > (44 << 20):
        # TODO(synk): stream weights (grid over layers / hid_p chunks with an "arbitrary" K axis)
        # when the fully-resident design exceeds v7x's 64 MiB per-TC VMEM.
        raise NotImplementedError(
            "FFN too large for the fully VMEM-resident kernel; needs a weight-streaming path.")
    vmem_limit = int(min(max(resident + (8 << 20), 16 << 20), 48 << 20))

    kernel = functools.partial(_ffn_fused_kernel, n_hidden=n_hidden)
    y_pad = pl.pallas_call(
        kernel,
        out_shape=jax.ShapeDtypeStruct((m_pad, out_p), jnp.bfloat16),
        grid=(m_pad // tile_m,),
        in_specs=in_specs,
        out_specs=pl.BlockSpec((tile_m, out_p), lambda i: (i, 0)),
        compiler_params=pltpu.CompilerParams(
            dimension_semantics=("parallel",),
            vmem_limit_bytes=vmem_limit,
        ),
    )(*operands)

    # Slice + upcast outside the kernel so the kernel's HBM write stays bf16 and lane-dense.
    return y_pad[:batch, :out_size].astype(jnp.float32)


def feedforward_reference(params, x, out_size):
    """Plain-JAX reference mirroring the kernel numerics: bf16 x / weights, f32 accumulate,
    bf16 activations between layers, bf16 output (like-for-like with the kernel)."""
    compute_dtype = params["w_in"].dtype
    in_p = params["w_in"].shape[0]
    xb = jnp.zeros((x.shape[0], in_p), compute_dtype).at[:, :x.shape[1]].set(
        x.astype(compute_dtype))
    act = jnp.maximum(
        jnp.dot(xb.astype(jnp.float32), params["w_in"].astype(jnp.float32)), 0.0
    ).astype(compute_dtype)
    for (w, b) in params["hidden"]:
        h = jnp.dot(act.astype(jnp.float32), w.astype(jnp.float32))
        act = jnp.maximum(h + b.astype(jnp.float32), 0.0).astype(compute_dtype)
    y = jnp.dot(act.astype(jnp.float32), params["w_out"].astype(jnp.float32))
    y = y.astype(jnp.bfloat16).astype(jnp.float32)
    return y[:, :out_size]


if __name__ == "__main__":
    # Small shapes consistent with the FFN classifier (module default hidden=250 -> padded 256).
    batch, in_size, out_size = 8, 32, 10
    hidden, depth = 250, 3

    key = jax.random.PRNGKey(0)
    kx, kx2, kp = jax.random.split(key, 3)
    params = init_feedforward_params(kp, in_size, out_size,
                                     hidden_layer_size=hidden, depth=depth)

    # Single-tile path (grid = (1,)).
    x = jax.random.normal(kx, (batch, in_size), jnp.float32)
    y = jax.block_until_ready(feedforward_forward(params, x, out_size))
    y_ref = feedforward_reference(params, x, out_size)
    assert y.shape == (batch, out_size), y.shape
    max_err = float(jnp.max(jnp.abs(y - y_ref)))
    assert jnp.allclose(y, y_ref, atol=2e-2, rtol=2e-2), f"mismatch (max err {max_err})"

    # Multi-tile path (batch=40 -> tile_m=24, grid=(2,)) exercises the parallel grid axis.
    x2 = jax.random.normal(kx2, (40, in_size), jnp.float32)
    y2 = jax.block_until_ready(feedforward_forward(params, x2, out_size))
    y2_ref = feedforward_reference(params, x2, out_size)
    assert y2.shape == (40, out_size), y2.shape
    max_err2 = float(jnp.max(jnp.abs(y2 - y2_ref)))
    assert jnp.allclose(y2, y2_ref, atol=2e-2, rtol=2e-2), f"mismatch (max err {max_err2})"

    print("KERNEL_OK")
</pallas_src>

<mosaic_0001>
module attributes {stable_mosaic.version = 11 : i64} {
  func.func @_ffn_fused_kernel(%arg0: i32, %arg1: memref<8x128xbf16, #tpu.memory_space<vmem>>, %arg2: memref<128x256xbf16, #tpu.memory_space<vmem>>, %arg3: memref<256x256xbf16, #tpu.memory_space<vmem>>, %arg4: memref<1x256xf32, #tpu.memory_space<vmem>>, %arg5: memref<256x128xbf16, #tpu.memory_space<vmem>>, %arg6: memref<8x128xbf16, #tpu.memory_space<vmem>>) attributes {dimension_semantics = [#tpu.dimension_semantics<parallel>], iteration_bounds = array<i64: 1>, scalar_prefetch = 0 : i64, scratch_operands = 0 : i64, tpu.core_type = #tpu.core_type<tc>, window_params = [{transform_indices = @transform_0, window_bounds = array<i64: 8, 128>}, {pipeline_mode = #tpu.pipeline_mode<synchronous>, transform_indices = @transform_1, window_bounds = array<i64: 128, 256>}, {pipeline_mode = #tpu.pipeline_mode<synchronous>, transform_indices = @transform_2, window_bounds = array<i64: 256, 256>}, {pipeline_mode = #tpu.pipeline_mode<synchronous>, transform_indices = @transform_3, window_bounds = array<i64: 1, 256>}, {pipeline_mode = #tpu.pipeline_mode<synchronous>, transform_indices = @transform_4, window_bounds = array<i64: 256, 128>}, {transform_indices = @transform_5, window_bounds = array<i64: 8, 128>}]} {
    %c0 = arith.constant 0 : index
    %c0_0 = arith.constant 0 : index
    %0 = vector.load %arg1[%c0, %c0_0] : memref<8x128xbf16, #tpu.memory_space<vmem>>, vector<8x128xbf16>
    %c0_1 = arith.constant 0 : index
    %c0_2 = arith.constant 0 : index
    %1 = vector.load %arg2[%c0_1, %c0_2] : memref<128x256xbf16, #tpu.memory_space<vmem>>, vector<128x256xbf16>
    %cst = arith.constant dense<0.000000e+00> : vector<8x256xf32>
    %2 = tpu.matmul %0, %1, %cst {dimension_numbers = #tpu.dot_dimension_numbers<[1], [0], [0], [1], [0, 0, 1, 1], [], []>} : vector<8x128xbf16>, vector<128x256xbf16>, vector<8x256xf32> -> vector<8x256xf32>
    %cst_3 = arith.constant 0.000000e+00 : f32
    %3 = vector.broadcast %cst_3 : f32 to vector<8x256xf32>
    %4 = arith.maximumf %2, %3 : vector<8x256xf32>
    %5 = arith.truncf %4 : vector<8x256xf32> to vector<8x256xbf16>
    %c0_4 = arith.constant 0 : index
    %c0_5 = arith.constant 0 : index
    %6 = vector.load %arg3[%c0_4, %c0_5] : memref<256x256xbf16, #tpu.memory_space<vmem>>, vector<256x256xbf16>
    %cst_6 = arith.constant dense<0.000000e+00> : vector<8x256xf32>
    %7 = tpu.matmul %5, %6, %cst_6 {dimension_numbers = #tpu.dot_dimension_numbers<[1], [0], [0], [1], [0, 0, 1, 1], [], []>} : vector<8x256xbf16>, vector<256x256xbf16>, vector<8x256xf32> -> vector<8x256xf32>
    %c0_7 = arith.constant 0 : index
    %c0_8 = arith.constant 0 : index
    %8 = vector.load %arg4[%c0_7, %c0_8] : memref<1x256xf32, #tpu.memory_space<vmem>>, vector<1x256xf32>
    %9 = vector.broadcast %8 : vector<1x256xf32> to vector<8x256xf32>
    %10 = arith.addf %7, %9 : vector<8x256xf32>
    %cst_9 = arith.constant 0.000000e+00 : f32
    %11 = vector.broadcast %cst_9 : f32 to vector<8x256xf32>
    %12 = arith.maximumf %10, %11 : vector<8x256xf32>
    %13 = arith.truncf %12 : vector<8x256xf32> to vector<8x256xbf16>
    %c0_10 = arith.constant 0 : index
    %c0_11 = arith.constant 0 : index
    %14 = vector.load %arg5[%c0_10, %c0_11] : memref<256x128xbf16, #tpu.memory_space<vmem>>, vector<256x128xbf16>
    %cst_12 = arith.constant dense<0.000000e+00> : vector<8x128xf32>
    %15 = tpu.matmul %13, %14, %cst_12 {dimension_numbers = #tpu.dot_dimension_numbers<[1], [0], [0], [1], [0, 0, 1, 1], [], []>} : vector<8x256xbf16>, vector<256x128xbf16>, vector<8x128xf32> -> vector<8x128xf32>
    %16 = arith.truncf %15 : vector<8x128xf32> to vector<8x128xbf16>
    %c0_13 = arith.constant 0 : index
    %c0_14 = arith.constant 0 : index
    %17 = vector.load %arg6[%c0_13, %c0_14] : memref<8x128xbf16, #tpu.memory_space<vmem>>, vector<8x128xbf16>
    tpu.vector_store %arg6[%c0_13, %c0_14], %16 {strides = array<i32>} : memref<8x128xbf16, #tpu.memory_space<vmem>>, vector<8x128xbf16>,
    return
  }
  func.func @transform_0(%arg0: i32) -> (i32, i32) {
    %c0_i32 = arith.constant 0 : i32
    %c0_i32_0 = arith.constant 0 : i32
    return %arg0, %c0_i32 : i32, i32
  }
  func.func @transform_1(%arg0: i32) -> (i32, i32) {
    %c0_i32 = arith.constant 0 : i32
    %c0_i32_0 = arith.constant 0 : i32
    %c0_i32_1 = arith.constant 0 : i32
    return %c0_i32, %c0_i32_0 : i32, i32
  }
  func.func @transform_2(%arg0: i32) -> (i32, i32) {
    %c0_i32 = arith.constant 0 : i32
    %c0_i32_0 = arith.constant 0 : i32
    %c0_i32_1 = arith.constant 0 : i32
    return %c0_i32, %c0_i32_0 : i32, i32
  }
  func.func @transform_3(%arg0: i32) -> (i32, i32) {
    %c0_i32 = arith.constant 0 : i32
    %c0_i32_0 = arith.constant 0 : i32
    %c0_i32_1 = arith.constant 0 : i32
    return %c0_i32, %c0_i32_0 : i32, i32
  }
  func.func @transform_4(%arg0: i32) -> (i32, i32) {
    %c0_i32 = arith.constant 0 : i32
    %c0_i32_0 = arith.constant 0 : i32
    %c0_i32_1 = arith.constant 0 : i32
    return %c0_i32, %c0_i32_0 : i32, i32
  }
  func.func @transform_5(%arg0: i32) -> (i32, i32) {
    %c0_i32 = arith.constant 0 : i32
    %c0_i32_0 = arith.constant 0 : i32
    return %arg0, %c0_i32 : i32, i32
  }
}

</mosaic_0001>

<llo_original>
// kernel: tpu_custom_call.1
$region0: #{tpu_custom_call.1}
  #allocation0 [shape = 'u32[]', space=smem, size = 0x4, offset = 0x4, fixed_abs, tag = 'smem constant byte address 0x4 - core index']
  #allocation1 [shape = 'u32[144,128]{1,0:T(1,128)}', space=vmem, size = 0x12000, scoped, tag = 'internal scratch']
  %s0 = inlined_call_operand.hbm [shape: bf16[8,128], index: 0, kind: input, shape index: {}]
  %s1 = inlined_call_operand.hbm [shape: bf16[128,256], index: 1, kind: input, shape index: {}]
  %s2 = inlined_call_operand.hbm [shape: bf16[256,256], index: 2, kind: input, shape index: {}]
  %s3 = inlined_call_operand.vmem [shape: f32[1,256], index: 3, kind: input, shape index: {}]
  %s4 = inlined_call_operand.hbm [shape: bf16[256,128], index: 4, kind: input, shape index: {}]
  %s5 = inlined_call_operand.hbm [shape: bf16[8,128], index: 5, kind: output, shape index: {}]
  %s6 = sld [smem:[#allocation0]]
  $region46: #{tpu_custom_call.1} parent=0
    _
  %s8 = ssub.s32 1, %s6
  %s9 = scalar_select 0, %s8, %s6
  $region1: #{tpu_custom_call.1} parent=0
    #allocation2 [shape = 'u8[2048]{0}', space=vmem, size = 0x800, scoped, tag = 'input window, operand 0, single buffered']
    #allocation3 [shape = 's32[1]{0}', space=sflag, size = 0x4, scoped, tag = 'scoped memory for tpu_custom_call.1']
    #allocation4 [shape = 's32[1]{0}', space=sflag, size = 0x4, scoped, tag = 'scoped memory for tpu_custom_call.1']
    #allocation5 [shape = 'u8[65536]{0}', space=vmem, size = 0x10000, scoped, tag = 'input window, operand 1, single buffered']
    #allocation6 [shape = 's32[1]{0}', space=sflag, size = 0x4, scoped, tag = 'scoped memory for tpu_custom_call.1']
    #allocation7 [shape = 'u8[131072]{0}', space=vmem, size = 0x20000, scoped, tag = 'input window, operand 2, single buffered']
    #allocation8 [shape = 'u8[65536]{0}', space=vmem, size = 0x10000, scoped, tag = 'input window, operand 4, single buffered']
    #allocation9 [shape = 's32[1]{0}', space=sflag, size = 0x4, scoped, tag = 'scoped memory for tpu_custom_call.1']
    #allocation10 [shape = 'u8[2048]{0}', space=vmem, size = 0x800, scoped, tag = 'output window, operand 0, single buffered']
    %10 = vsyncpa [#allocation3], 0
    %11 = vsyncpa [#allocation6], 0
    %12 = vsyncpa [#allocation9], 0
    %13 = vsyncpa [#allocation4], 0
    // Predicated region
    $region2: #{tpu_custom_call.1} parent=1 // pred_check
      _
    $region3: #{tpu_custom_call.1} parent=1 // pred_check_branch
      %15 = sbr.rel (0) target = $region5
    $region4: #{tpu_custom_call.1} parent=1 // pred_region
      %s17 = ssub.s32 64, 64
      %18 = vsyncadd [#allocation3], %s17
      %s20 = sshll.u32 [#allocation2], 4
      %s21 = int_to_ptr.vmem [resolvable:$true] %s20
      %23 = dma.hbm_to_vmem [thread:$0]  %s0, 64, %s21, [#allocation3]
    $region5: #{tpu_custom_call.1} parent=1 // pred_fallthru
      _
    // Predicated region
    $region6: #{tpu_custom_call.1} parent=1 // pred_check
      _
    $region7: #{tpu_custom_call.1} parent=1 // pred_check_branch
      %25 = sbr.rel (0) target = $region9
    $region8: #{tpu_custom_call.1} parent=1 // pred_region
      %s27 = ssub.s32 2048, 2048
      %28 = vsyncadd [#allocation6], %s27
      %s29 = sshll.u32 [#allocation5], 4
      %s30 = int_to_ptr.vmem [resolvable:$true] %s29
      %35 = dma.hbm_to_vmem [thread:$0]  %s1, 2048, %s30, [#allocation6], 128, 128, 8
    $region9: #{tpu_custom_call.1} parent=1 // pred_fallthru
      _
    // Predicated region
    $region10: #{tpu_custom_call.1} parent=1 // pred_check
      _
    $region11: #{tpu_custom_call.1} parent=1 // pred_check_branch
      %37 = sbr.rel (0) target = $region13
    $region12: #{tpu_custom_call.1} parent=1 // pred_region
      %s39 = ssub.s32 4096, 4096
      %40 = vsyncadd [#allocation6], %s39
      %s41 = sshll.u32 [#allocation7], 4
      %s42 = int_to_ptr.vmem [resolvable:$true] %s41
      %47 = dma.hbm_to_vmem [thread:$0]  %s2, 4096, %s42, [#allocation6], 128, 128, 8
    $region13: #{tpu_custom_call.1} parent=1 // pred_fallthru
      _
    // Predicated region
    $region14: #{tpu_custom_call.1} parent=1 // pred_check
      _
    $region15: #{tpu_custom_call.1} parent=1 // pred_check_branch
      %49 = sbr.rel (0) target = $region17
    $region16: #{tpu_custom_call.1} parent=1 // pred_region
      _
    $region17: #{tpu_custom_call.1} parent=1 // pred_fallthru
      _
    // Predicated region
    $region18: #{tpu_custom_call.1} parent=1 // pred_check
      _
    $region19: #{tpu_custom_call.1} parent=1 // pred_check_branch
      %51 = sbr.rel (0) target = $region21
    $region20: #{tpu_custom_call.1} parent=1 // pred_region
      %s53 = ssub.s32 2048, 2048
      %54 = vsyncadd [#allocation9], %s53
      %s55 = sshll.u32 [#allocation8], 4
      %s56 = int_to_ptr.vmem [resolvable:$true] %s55
      %61 = dma.hbm_to_vmem [thread:$0]  %s4, 2048, %s56, [#allocation9], 64, 64, 4
    $region21: #{tpu_custom_call.1} parent=1 // pred_fallthru
      _
    // Predicated region
    $region22: #{tpu_custom_call.1} parent=1 // pred_check
      _
    $region23: #{tpu_custom_call.1} parent=1 // pred_check_branch
      %63 = sbr.rel (0) target = $region25
    $region24: #{tpu_custom_call.1} parent=1 // pred_region
      %64 = dma.done [#allocation3], 64
    $region25: #{tpu_custom_call.1} parent=1 // pred_fallthru
      _
    // Predicated region
    $region26: #{tpu_custom_call.1} parent=1 // pred_check
      _
    $region27: #{tpu_custom_call.1} parent=1 // pred_check_branch
      %66 = sbr.rel (0) target = $region29
    $region28: #{tpu_custom_call.1} parent=1 // pred_region
      %67 = dma.done [#allocation6], 2048
    $region29: #{tpu_custom_call.1} parent=1 // pred_fallthru
      _
    // Predicated region
    $region30: #{tpu_custom_call.1} parent=1 // pred_check
      _
    $region31: #{tpu_custom_call.1} parent=1 // pred_check_branch
      %69 = sbr.rel (0) target = $region33
    $region32: #{tpu_custom_call.1} parent=1 // pred_region
      %70 = dma.done [#allocation6], 4096
    $region33: #{tpu_custom_call.1} parent=1 // pred_fallthru
      _
    // Predicated region
    $region34: #{tpu_custom_call.1} parent=1 // pred_check
      _
    $region35: #{tpu_custom_call.1} parent=1 // pred_check_branch
      %72 = sbr.rel (0) target = $region37
    $region36: #{tpu_custom_call.1} parent=1 // pred_region
      %73 = dma.done [#allocation9], 2048
    $region37: #{tpu_custom_call.1} parent=1 // pred_fallthru
      _
    %v75 = vld [vmem:[#allocation2] sm:$0xf]
    %v76 = vld [vmem:[#allocation5] sm:$0xff]
    %v77 = vld [vmem:[#allocation5 + $0x8] sm:$0xff]
    %v78 = vld [vmem:[#allocation5 + $0x10] sm:$0xff]
    %v79 = vld [vmem:[#allocation5 + $0x18] sm:$0xff]
    %v80 = vld [vmem:[#allocation5 + $0x20] sm:$0xff]
    %v81 = vld [vmem:[#allocation5 + $0x28] sm:$0xff]
    %v82 = vld [vmem:[#allocation5 + $0x30] sm:$0xff]
    %v83 = vld [vmem:[#allocation5 + $0x38] sm:$0xff]
    %v84 = vld [vmem:[#allocation5 + $0x40] sm:$0xff]
    %v85 = vld [vmem:[#allocation5 + $0x48] sm:$0xff]
    %v86 = vld [vmem:[#allocation5 + $0x50] sm:$0xff]
    %v87 = vld [vmem:[#allocation5 + $0x58] sm:$0xff]
    %v88 = vld [vmem:[#allocation5 + $0x60] sm:$0xff]
    %v89 = vld [vmem:[#allocation5 + $0x68] sm:$0xff]
    %v90 = vld [vmem:[#allocation5 + $0x70] sm:$0xff]
    %v91 = vld [vmem:[#allocation5 + $0x78] sm:$0xff]
    %v108 = vunpack.c.l.b16 %v76
    %v109 = vunpack.c.h.b16 %v76
    %v110 = vunpack.c.l.b16 %v77
    %v111 = vunpack.c.h.b16 %v77
    %v112 = vunpack.c.l.b16 %v78
    %v113 = vunpack.c.h.b16 %v78
    %v114 = vunpack.c.l.b16 %v79
    %v115 = vunpack.c.h.b16 %v79
    %v116 = vunpack.c.l.b16 %v80
    %v117 = vunpack.c.h.b16 %v80
    %v118 = vunpack.c.l.b16 %v81
    %v119 = vunpack.c.h.b16 %v81
    %v120 = vunpack.c.l.b16 %v82
    %v121 = vunpack.c.h.b16 %v82
    %v122 = vunpack.c.l.b16 %v83
    %v123 = vunpack.c.h.b16 %v83
    %v124 = vunpack.c.l.b16 %v84
    %v125 = vunpack.c.h.b16 %v84
    %v126 = vunpack.c.l.b16 %v85
    %v127 = vunpack.c.h.b16 %v85
    %v128 = vunpack.c.l.b16 %v86
    %v129 = vunpack.c.h.b16 %v86
    %v130 = vunpack.c.l.b16 %v87
    %v131 = vunpack.c.h.b16 %v87
    %v132 = vunpack.c.l.b16 %v88
    %v133 = vunpack.c.h.b16 %v88
    %v134 = vunpack.c.l.b16 %v89
    %v135 = vunpack.c.h.b16 %v89
    %v136 = vunpack.c.l.b16 %v90
    %v137 = vunpack.c.h.b16 %v90
    %v138 = vunpack.c.l.b16 %v91
    %v139 = vunpack.c.h.b16 %v91
    %v140 = vpack.c.b16 %v110, %v108
    %v141 = vpack.c.b16 %v111, %v109
    %v142 = vpack.c.b16 %v114, %v112
    %v143 = vpack.c.b16 %v115, %v113
    %v144 = vpack.c.b16 %v118, %v116
    %v145 = vpack.c.b16 %v119, %v117
    %v146 = vpack.c.b16 %v122, %v120
    %v147 = vpack.c.b16 %v123, %v121
    %v148 = vpack.c.b16 %v126, %v124
    %v149 = vpack.c.b16 %v127, %v125
    %v150 = vpack.c.b16 %v130, %v128
    %v151 = vpack.c.b16 %v131, %v129
    %v152 = vpack.c.b16 %v134, %v132
    %v153 = vpack.c.b16 %v135, %v133
    %v154 = vpack.c.b16 %v138, %v136
    %v155 = vpack.c.b16 %v139, %v137
    %172 = vmatprep.subr.bf16.mxu0 %v141
    %173 = vmatpush1.bf16.msra.mxu0 %v140
    %174 = vmatprep.subr.bf16.mxu0 %v143
    %175 = vmatpush1.bf16.msra.mxu0 %v142
    %176 = vmatprep.subr.bf16.mxu0 %v145
    %177 = vmatpush1.bf16.msra.mxu0 %v144
    %178 = vmatprep.subr.bf16.mxu0 %v147
    %179 = vmatpush1.bf16.msra.mxu0 %v146
    %180 = vmatprep.subr.bf16.mxu0 %v149
    %181 = vmatpush1.bf16.msra.mxu0 %v148
    %182 = vmatprep.subr.bf16.mxu0 %v151
    %183 = vmatpush1.bf16.msra.mxu0 %v150
    %184 = vmatprep.subr.bf16.mxu0 %v153
    %185 = vmatpush1.bf16.msra.mxu0 %v152
    %186 = vmatprep.subr.bf16.mxu0 %v155
    %187 = vmatpush1.bf16.msra.mxu0 %v154
    %188 = vmatprep.subr.bf16.mxu0 0
    %189 = vmatpush1.bf16.msra.mxu0 0
    %190 = vmatprep.subr.bf16.mxu0 0
    %191 = vmatpush1.bf16.msra.mxu0 0
    %192 = vmatprep.subr.bf16.mxu0 0
    %193 = vmatpush1.bf16.msra.mxu0 0
    %194 = vmatprep.subr.bf16.mxu0 0
    %195 = vmatpush1.bf16.msra.mxu0 0
    %196 = vmatprep.subr.bf16.mxu0 0
    %197 = vmatpush1.bf16.msra.mxu0 0
    %198 = vmatprep.subr.bf16.mxu0 0
    %199 = vmatpush1.bf16.msra.mxu0 0
    %200 = vmatprep.subr.bf16.mxu0 0
    %201 = vmatpush1.bf16.msra.mxu0 0
    %202 = vmatprep.subr.bf16.mxu0 0
    %203 = vmatpush1.bf16.msra.mxu0 0
    %204 = vmatprep.mubr.bf16.mxu0 0
    %205 = vmatmul.mubr.bf16.gmra.mrb[0].mxu0 %v75
    %v206 = vpop.f32.mrb[0].mxu0
    %v207 = vadd.f32 0.0, %v206
    %v208 = vpop.f32.mrb[0].mxu0
    %v209 = vadd.f32 0.0, %v208
    %v210 = vpop.f32.mrb[0].mxu0
    %v211 = vpop.f32.mrb[0].mxu0
    %212 = vdwg.mxu0
    %v213 = vmax.f32 %v207, 0.0
    %v214 = vmax.f32 %v209, 0.0
    %v215 = vpack.c.bf16 %v213, %v213
    %v216 = vpack.c.bf16 %v214, %v214
    %v217 = vld [vmem:[#allocation7] sm:$0xff]
    %v218 = vld [vmem:[#allocation7 + $0x8] sm:$0xff]
    %v219 = vld [vmem:[#allocation7 + $0x10] sm:$0xff]
    %v220 = vld [vmem:[#allocation7 + $0x18] sm:$0xff]
    %v221 = vld [vmem:[#allocation7 + $0x20] sm:$0xff]
    %v222 = vld [vmem:[#allocation7 + $0x28] sm:$0xff]
    %v223 = vld [vmem:[#allocation7 + $0x30] sm:$0xff]
    %v224 = vld [vmem:[#allocation7 + $0x38] sm:$0xff]
    %v225 = vld [vmem:[#allocation7 + $0x40] sm:$0xff]
    %v226 = vld [vmem:[#allocation7 + $0x48] sm:$0xff]
    %v227 = vld [vmem:[#allocation7 + $0x50] sm:$0xff]
    %v228 = vld [vmem:[#allocation7 + $0x58] sm:$0xff]
    %v229 = vld [vmem:[#allocation7 + $0x60] sm:$0xff]
    %v230 = vld [vmem:[#allocation7 + $0x68] sm:$0xff]
    %v231 = vld [vmem:[#allocation7 + $0x70] sm:$0xff]
    %v232 = vld [vmem:[#allocation7 + $0x78] sm:$0xff]
    %v233 = vld [vmem:[#allocation7 + $0x80] sm:$0xff]
    %v234 = vld [vmem:[#allocation7 + $0x88] sm:$0xff]
    %v235 = vld [vmem:[#allocation7 + $0x90] sm:$0xff]
    %v236 = vld [vmem:[#allocation7 + $0x98] sm:$0xff]
    %v237 = vld [vmem:[#allocation7 + $0xa0] sm:$0xff]
    %v238 = vld [vmem:[#allocation7 + $0xa8] sm:$0xff]
    %v239 = vld [vmem:[#allocation7 + $0xb0] sm:$0xff]
    %v240 = vld [vmem:[#allocation7 + $0xb8] sm:$0xff]
    %v241 = vld [vmem:[#allocation7 + $0xc0] sm:$0xff]
    %v242 = vld [vmem:[#allocation7 + $0xc8] sm:$0xff]
    %v243 = vld [vmem:[#allocation7 + $0xd0] sm:$0xff]
    %v244 = vld [vmem:[#allocation7 + $0xd8] sm:$0xff]
    %v245 = vld [vmem:[#allocation7 + $0xe0] sm:$0xff]
    %v246 = vld [vmem:[#allocation7 + $0xe8] sm:$0xff]
    %v247 = vld [vmem:[#allocation7 + $0xf0] sm:$0xff]
    %v248 = vld [vmem:[#allocation7 + $0xf8] sm:$0xff]
    %v249 = vld [vmem:[%s3] sm:$0x3]
    %v251 = vlaneseq
    %v252 = vshrl.u32 %v251, 7
    %v253 = vsub.s32 0, %v252
    %v254 = vrot.slane %v249, %v253
    %v255 = vlaneseq
    %v256 = vshrl.u32 %v255, 7
    %v257 = vsub.s32 1, %v256
    %v258 = vrot.slane %v249, %v257
    %v293 = vunpack.c.l.b16 %v217
    %v294 = vunpack.c.h.b16 %v217
    %v295 = vunpack.c.l.b16 %v218
    %v296 = vunpack.c.h.b16 %v218
    %v297 = vunpack.c.l.b16 %v219
    %v298 = vunpack.c.h.b16 %v219
    %v299 = vunpack.c.l.b16 %v220
    %v300 = vunpack.c.h.b16 %v220
    %v301 = vunpack.c.l.b16 %v221
    %v302 = vunpack.c.h.b16 %v221
    %v303 = vunpack.c.l.b16 %v222
    %v304 = vunpack.c.h.b16 %v222
    %v305 = vunpack.c.l.b16 %v223
    %v306 = vunpack.c.h.b16 %v223
    %v307 = vunpack.c.l.b16 %v224
    %v308 = vunpack.c.h.b16 %v224
    %v309 = vunpack.c.l.b16 %v225
    %v310 = vunpack.c.h.b16 %v225
    %v311 = vunpack.c.l.b16 %v226
    %v312 = vunpack.c.h.b16 %v226
    %v313 = vunpack.c.l.b16 %v227
    %v314 = vunpack.c.h.b16 %v227
    %v315 = vunpack.c.l.b16 %v228
    %v316 = vunpack.c.h.b16 %v228
    %v317 = vunpack.c.l.b16 %v229
    %v318 = vunpack.c.h.b16 %v229
    %v319 = vunpack.c.l.b16 %v230
    %v320 = vunpack.c.h.b16 %v230
    %v321 = vunpack.c.l.b16 %v231
    %v322 = vunpack.c.h.b16 %v231
    %v323 = vunpack.c.l.b16 %v232
    %v324 = vunpack.c.h.b16 %v232
    %v325 = vunpack.c.l.b16 %v233
    %v326 = vunpack.c.h.b16 %v233
    %v327 = vunpack.c.l.b16 %v234
    %v328 = vunpack.c.h.b16 %v234
    %v329 = vunpack.c.l.b16 %v235
    %v330 = vunpack.c.h.b16 %v235
    %v331 = vunpack.c.l.b16 %v236
    %v332 = vunpack.c.h.b16 %v236
    %v333 = vunpack.c.l.b16 %v237
    %v334 = vunpack.c.h.b16 %v237
    %v335 = vunpack.c.l.b16 %v238
    %v336 = vunpack.c.h.b16 %v238
    %v337 = vunpack.c.l.b16 %v239
    %v338 = vunpack.c.h.b16 %v239
    %v339 = vunpack.c.l.b16 %v240
    %v340 = vunpack.c.h.b16 %v240
    %v341 = vunpack.c.l.b16 %v241
    %v342 = vunpack.c.h.b16 %v241
    %v343 = vunpack.c.l.b16 %v242
    %v344 = vunpack.c.h.b16 %v242
    %v345 = vunpack.c.l.b16 %v243
    %v346 = vunpack.c.h.b16 %v243
    %v347 = vunpack.c.l.b16 %v244
    %v348 = vunpack.c.h.b16 %v244
    %v349 = vunpack.c.l.b16 %v245
    %v350 = vunpack.c.h.b16 %v245
    %v351 = vunpack.c.l.b16 %v246
    %v352 = vunpack.c.h.b16 %v246
    %v353 = vunpack.c.l.b16 %v247
    %v354 = vunpack.c.h.b16 %v247
    %v355 = vunpack.c.l.b16 %v248
    %v356 = vunpack.c.h.b16 %v248
    %v357 = vpack.c.b16 %v295, %v293
    %v358 = vpack.c.b16 %v296, %v294
    %v359 = vpack.c.b16 %v299, %v297
    %v360 = vpack.c.b16 %v300, %v298
    %v361 = vpack.c.b16 %v303, %v301
    %v362 = vpack.c.b16 %v304, %v302
    %v363 = vpack.c.b16 %v307, %v305
    %v364 = vpack.c.b16 %v308, %v306
    %v365 = vpack.c.b16 %v311, %v309
    %v366 = vpack.c.b16 %v312, %v310
    %v367 = vpack.c.b16 %v315, %v313
    %v368 = vpack.c.b16 %v316, %v314
    %v369 = vpack.c.b16 %v319, %v317
    %v370 = vpack.c.b16 %v320, %v318
    %v371 = vpack.c.b16 %v323, %v321
    %v372 = vpack.c.b16 %v324, %v322
    %v373 = vpack.c.b16 %v327, %v325
    %v374 = vpack.c.b16 %v328, %v326
    %v375 = vpack.c.b16 %v331, %v329
    %v376 = vpack.c.b16 %v332, %v330
    %v377 = vpack.c.b16 %v335, %v333
    %v378 = vpack.c.b16 %v336, %v334
    %v379 = vpack.c.b16 %v339, %v337
    %v380 = vpack.c.b16 %v340, %v338
    %v381 = vpack.c.b16 %v343, %v341
    %v382 = vpack.c.b16 %v344, %v342
    %v383 = vpack.c.b16 %v347, %v345
    %v384 = vpack.c.b16 %v348, %v346
    %v385 = vpack.c.b16 %v351, %v349
    %v386 = vpack.c.b16 %v352, %v350
    %v387 = vpack.c.b16 %v355, %v353
    %v388 = vpack.c.b16 %v356, %v354
    %421 = vmatprep.subr.bf16.mxu0 %v358
    %422 = vmatpush1.bf16.msra.mxu0 %v357
    %423 = vmatprep.subr.bf16.mxu0 %v360
    %424 = vmatpush1.bf16.msra.mxu0 %v359
    %425 = vmatprep.subr.bf16.mxu0 %v362
    %426 = vmatpush1.bf16.msra.mxu0 %v361
    %427 = vmatprep.subr.bf16.mxu0 %v364
    %428 = vmatpush1.bf16.msra.mxu0 %v363
    %429 = vmatprep.subr.bf16.mxu0 %v366
    %430 = vmatpush1.bf16.msra.mxu0 %v365
    %431 = vmatprep.subr.bf16.mxu0 %v368
    %432 = vmatpush1.bf16.msra.mxu0 %v367
    %433 = vmatprep.subr.bf16.mxu0 %v370
    %434 = vmatpush1.bf16.msra.mxu0 %v369
    %435 = vmatprep.subr.bf16.mxu0 %v372
    %436 = vmatpush1.bf16.msra.mxu0 %v371
    %437 = vmatprep.subr.bf16.mxu0 %v374
    %438 = vmatpush1.bf16.msra.mxu0 %v373
    %439 = vmatprep.subr.bf16.mxu0 %v376
    %440 = vmatpush1.bf16.msra.mxu0 %v375
    %441 = vmatprep.subr.bf16.mxu0 %v378
    %442 = vmatpush1.bf16.msra.mxu0 %v377
    %443 = vmatprep.subr.bf16.mxu0 %v380
    %444 = vmatpush1.bf16.msra.mxu0 %v379
    %445 = vmatprep.subr.bf16.mxu0 %v382
    %446 = vmatpush1.bf16.msra.mxu0 %v381
    %447 = vmatprep.subr.bf16.mxu0 %v384
    %448 = vmatpush1.bf16.msra.mxu0 %v383
    %449 = vmatprep.subr.bf16.mxu0 %v386
    %450 = vmatpush1.bf16.msra.mxu0 %v385
    %451 = vmatprep.subr.bf16.mxu0 %v388
    %452 = vmatpush1.bf16.msra.mxu0 %v387
    %453 = vmatprep.mubr.bf16.mxu0 %v216
    %454 = vmatmul.mubr.bf16.gmra.mrb[0].mxu0 %v215
    %v455 = vpop.f32.mrb[0].mxu0
    %v456 = vadd.f32 %v254, %v455
    %v457 = vpop.f32.mrb[0].mxu0
    %v458 = vadd.f32 %v258, %v457
    %v459 = vpop.f32.mrb[0].mxu0
    %v460 = vpop.f32.mrb[0].mxu0
    %461 = vdwg.mxu0
    %v462 = vmax.f32 %v456, 0.0
    %v463 = vmax.f32 %v458, 0.0
    %v464 = vpack.c.bf16 %v462, %v462
    %v465 = vpack.c.bf16 %v463, %v463
    %v466 = vld [vmem:[#allocation8] sm:$0xf]
    %v467 = vld [vmem:[#allocation8 + $0x4] sm:$0xf]
    %v468 = vld [vmem:[#allocation8 + $0x8] sm:$0xf]
    %v469 = vld [vmem:[#allocation8 + $0xc] sm:$0xf]
    %v470 = vld [vmem:[#allocation8 + $0x10] sm:$0xf]
    %v471 = vld [vmem:[#allocation8 + $0x14] sm:$0xf]
    %v472 = vld [vmem:[#allocation8 + $0x18] sm:$0xf]
    %v473 = vld [vmem:[#allocation8 + $0x1c] sm:$0xf]
    %v474 = vld [vmem:[#allocation8 + $0x20] sm:$0xf]
    %v475 = vld [vmem:[#allocation8 + $0x24] sm:$0xf]
    %v476 = vld [vmem:[#allocation8 + $0x28] sm:$0xf]
    %v477 = vld [vmem:[#allocation8 + $0x2c] sm:$0xf]
    %v478 = vld [vmem:[#allocation8 + $0x30] sm:$0xf]
    %v479 = vld [vmem:[#allocation8 + $0x34] sm:$0xf]
    %v480 = vld [vmem:[#allocation8 + $0x38] sm:$0xf]
    %v481 = vld [vmem:[#allocation8 + $0x3c] sm:$0xf]
    %v482 = vld [vmem:[#allocation8 + $0x40] sm:$0xf]
    %v483 = vld [vmem:[#allocation8 + $0x44] sm:$0xf]
    %v484 = vld [vmem:[#allocation8 + $0x48] sm:$0xf]
    %v485 = vld [vmem:[#allocation8 + $0x4c] sm:$0xf]
    %v486 = vld [vmem:[#allocation8 + $0x50] sm:$0xf]
    %v487 = vld [vmem:[#allocation8 + $0x54] sm:$0xf]
    %v488 = vld [vmem:[#allocation8 + $0x58] sm:$0xf]
    %v489 = vld [vmem:[#allocation8 + $0x5c] sm:$0xf]
    %v490 = vld [vmem:[#allocation8 + $0x60] sm:$0xf]
    %v491 = vld [vmem:[#allocation8 + $0x64] sm:$0xf]
    %v492 = vld [vmem:[#allocation8 + $0x68] sm:$0xf]
    %v493 = vld [vmem:[#allocation8 + $0x6c] sm:$0xf]
    %v494 = vld [vmem:[#allocation8 + $0x70] sm:$0xf]
    %v495 = vld [vmem:[#allocation8 + $0x74] sm:$0xf]
    %v496 = vld [vmem:[#allocation8 + $0x78] sm:$0xf]
    %v497 = vld [vmem:[#allocation8 + $0x7c] sm:$0xf]
    %v530 = vunpack.c.l.b16 %v466
    %v531 = vunpack.c.l.b16 %v467
    %v532 = vunpack.c.l.b16 %v468
    %v533 = vunpack.c.l.b16 %v469
    %v534 = vunpack.c.l.b16 %v470
    %v535 = vunpack.c.l.b16 %v471
    %v536 = vunpack.c.l.b16 %v472
    %v537 = vunpack.c.l.b16 %v473
    %v538 = vunpack.c.l.b16 %v474
    %v539 = vunpack.c.l.b16 %v475
    %v540 = vunpack.c.l.b16 %v476
    %v541 = vunpack.c.l.b16 %v477
    %v542 = vunpack.c.l.b16 %v478
    %v543 = vunpack.c.l.b16 %v479
    %v544 = vunpack.c.l.b16 %v480
    %v545 = vunpack.c.l.b16 %v481
    %v546 = vunpack.c.l.b16 %v482
    %v547 = vunpack.c.l.b16 %v483
    %v548 = vunpack.c.l.b16 %v484
    %v549 = vunpack.c.l.b16 %v485
    %v550 = vunpack.c.l.b16 %v486
    %v551 = vunpack.c.l.b16 %v487
    %v552 = vunpack.c.l.b16 %v488
    %v553 = vunpack.c.l.b16 %v489
    %v554 = vunpack.c.l.b16 %v490
    %v555 = vunpack.c.l.b16 %v491
    %v556 = vunpack.c.l.b16 %v492
    %v557 = vunpack.c.l.b16 %v493
    %v558 = vunpack.c.l.b16 %v494
    %v559 = vunpack.c.l.b16 %v495
    %v560 = vunpack.c.l.b16 %v496
    %v561 = vunpack.c.l.b16 %v497
    %v562 = vpack.c.b16 %v531, %v530
    %v563 = vpack.c.b16 %v533, %v532
    %v564 = vpack.c.b16 %v535, %v534
    %v565 = vpack.c.b16 %v537, %v536
    %v566 = vpack.c.b16 %v539, %v538
    %v567 = vpack.c.b16 %v541, %v540
    %v568 = vpack.c.b16 %v543, %v542
    %v569 = vpack.c.b16 %v545, %v544
    %v570 = vpack.c.b16 %v547, %v546
    %v571 = vpack.c.b16 %v549, %v548
    %v572 = vpack.c.b16 %v551, %v550
    %v573 = vpack.c.b16 %v553, %v552
    %v574 = vpack.c.b16 %v555, %v554
    %v575 = vpack.c.b16 %v557, %v556
    %v576 = vpack.c.b16 %v559, %v558
    %v577 = vpack.c.b16 %v561, %v560
    %594 = vmatprep.subr.bf16.mxu0 0
    %595 = vmatpush1.bf16.msra.mxu0 %v562
    %596 = vmatprep.subr.bf16.mxu0 0
    %597 = vmatpush1.bf16.msra.mxu0 %v563
    %598 = vmatprep.subr.bf16.mxu0 0
    %599 = vmatpush1.bf16.msra.mxu0 %v564
    %600 = vmatprep.subr.bf16.mxu0 0
    %601 = vmatpush1.bf16.msra.mxu0 %v565
    %602 = vmatprep.subr.bf16.mxu0 0
    %603 = vmatpush1.bf16.msra.mxu0 %v566
    %604 = vmatprep.subr.bf16.mxu0 0
    %605 = vmatpush1.bf16.msra.mxu0 %v567
    %606 = vmatprep.subr.bf16.mxu0 0
    %607 = vmatpush1.bf16.msra.mxu0 %v568
    %608 = vmatprep.subr.bf16.mxu0 0
    %609 = vmatpush1.bf16.msra.mxu0 %v569
    %610 = vmatprep.subr.bf16.mxu0 0
    %611 = vmatpush1.bf16.msra.mxu0 %v570
    %612 = vmatprep.subr.bf16.mxu0 0
    %613 = vmatpush1.bf16.msra.mxu0 %v571
    %614 = vmatprep.subr.bf16.mxu0 0
    %615 = vmatpush1.bf16.msra.mxu0 %v572
    %616 = vmatprep.subr.bf16.mxu0 0
    %617 = vmatpush1.bf16.msra.mxu0 %v573
    %618 = vmatprep.subr.bf16.mxu0 0
    %619 = vmatpush1.bf16.msra.mxu0 %v574
    %620 = vmatprep.subr.bf16.mxu0 0
    %621 = vmatpush1.bf16.msra.mxu0 %v575
    %622 = vmatprep.subr.bf16.mxu0 0
    %623 = vmatpush1.bf16.msra.mxu0 %v576
    %624 = vmatprep.subr.bf16.mxu0 0
    %625 = vmatpush1.bf16.msra.mxu0 %v577
    %626 = vmatprep.mubr.bf16.mxu0 %v465
    %627 = vmatmul.mubr.bf16.gmra.mrb[0].mxu0 %v464
    %v628 = vpop.f32.mrb[0].mxu0
    %v629 = vadd.f32 0.0, %v628
    %v630 = vpop.f32.mrb[0].mxu0
    %v631 = vpop.f32.mrb[0].mxu0
    %v632 = vpop.f32.mrb[0].mxu0
    %633 = vdwg.mxu0
    %v634 = vpack.c.bf16 %v629, %v629
    %635 = vst [vmem:[#allocation10] sm:$0xf] %v634
    // Predicated region
    $region38: #{tpu_custom_call.1} parent=1 // pred_check
      _
    $region39: #{tpu_custom_call.1} parent=1 // pred_check_branch
      %637 = sbr.rel (0) target = $region41
    $region40: #{tpu_custom_call.1} parent=1 // pred_region
      %s639 = ssub.s32 64, 64
      %640 = vsyncadd [#allocation4], %s639
      %s642 = sshll.u32 [#allocation10], 4
      %s643 = int_to_ptr.vmem [resolvable:$true] %s642
      %645 = dma.vmem_to_hbm [thread:$0]  %s643, 64, %s5, [#allocation4]
    $region41: #{tpu_custom_call.1} parent=1 // pred_fallthru
      _
    // Predicated region
    $region42: #{tpu_custom_call.1} parent=1 // pred_check
      _
    $region43: #{tpu_custom_call.1} parent=1 // pred_check_branch
      %647 = sbr.rel (0) target = $region45
    $region44: #{tpu_custom_call.1} parent=1 // pred_region
      %648 = dma.done [#allocation4], 64
    $region45: #{tpu_custom_call.1} parent=1 // pred_fallthru
      _
    %649 = vsyncpa [#allocation3], 1
    %650 = vsyncpa [#allocation6], 1
    %651 = vsyncpa [#allocation9], 1
    %652 = vsyncpa [#allocation4], 1

</llo_original>
